<compile_context>
chip_gen: v5e
topology: v5e:2x2
jax: 0.10.0
libtpu: 0.0.40
codegen_flags: <defaults>
</compile_context>

<pallas_src>
import functools
import math

import jax
import jax.numpy as jnp
from jax import lax
from jax.experimental import pallas as pl
from jax.experimental.pallas import tpu as pltpu


def _round_up(x, n):
    return ((x + n - 1) // n) * n


def _gelu_exact(x):
    # Matches torch.nn.GELU() default (exact erf formulation).
    return 0.5 * x * (1.0 + lax.erf(x * (1.0 / math.sqrt(2.0))))


def _pick_hidden_tile(hdim, th):
    """Largest multiple of 128 that divides hdim and is <= th; else whole H."""
    if hdim % 128 == 0:
        t = (min(th, hdim) // 128) * 128
        while t >= 128:
            if hdim % t == 0:
                return t
            t -= 128
    return hdim


def _mlp_kernel_single(x_ref, w1_ref, b1_ref, w2_ref, b2_ref, o_ref):
    # Grid = (row_tiles,).  Whole hidden dim in one chunk -> no accumulator.
    h = jnp.dot(x_ref[...], w1_ref[...], preferred_element_type=jnp.float32)
    h = _gelu_exact(h + b1_ref[...].astype(jnp.float32))
    # Dropout(p=0.0) is the identity — nothing to do.
    y = jnp.dot(h.astype(w2_ref.dtype), w2_ref[...],
                preferred_element_type=jnp.float32)
    o_ref[...] = (y + b2_ref[...].astype(jnp.float32)).astype(o_ref.dtype)


def _mlp_kernel_multi(x_ref, w1_ref, b1_ref, w2_ref, b2_ref, o_ref, acc_ref):
    # Grid = (row_tiles, hidden_chunks); hidden axis is the reduction.
    # x_ref  : (tm, D_in)   row tile of flattened input
    # w1_ref : (D_in, tH)   fc1 weight chunk (transposed vs. PyTorch)
    # b1_ref : (1, tH)      fc1 bias chunk
    # w2_ref : (tH, D_out)  fc2 weight chunk (transposed vs. PyTorch)
    # b2_ref : (1, D_out)   fc2 bias
    # o_ref  : (tm, D_out)
    # acc_ref: (tm, D_out)  f32 accumulator (VMEM scratch)
    k = pl.program_id(1)

    @pl.when(k == 0)
    def _():
        # Seed the accumulator with the fc2 bias (added exactly once), so the
        # finalize step is just a cast+store.
        acc_ref[...] = jnp.broadcast_to(
            b2_ref[...].astype(jnp.float32), acc_ref.shape)

    # fc1 partial: native-dtype matmul, f32 accumulation on the MXU.
    h = jnp.dot(x_ref[...], w1_ref[...], preferred_element_type=jnp.float32)
    h = _gelu_exact(h + b1_ref[...].astype(jnp.float32))
    # Dropout(p=0.0) is the identity — nothing to do.

    # fc2 partial contribution of this hidden chunk.
    acc_ref[...] += jnp.dot(h.astype(w2_ref.dtype), w2_ref[...],
                            preferred_element_type=jnp.float32)

    @pl.when(k == pl.num_programs(1) - 1)
    def _():
        o_ref[...] = acc_ref[...].astype(o_ref.dtype)


@functools.partial(jax.jit, static_argnames=("tm", "th"))
def mlp_pallas(x, w1, b1, w2, b2, *, tm=512, th=512):
    """x: (..., D_in) -> (..., D_out).  Weights stored as w1 (D_in, H),
    w2 (H, D_out), i.e. already transposed vs. the PyTorch nn.Linear layout."""
    orig_shape = x.shape
    d_in = orig_shape[-1]
    hdim = w1.shape[1]
    d_out = w2.shape[1]

    x2 = x.reshape(-1, d_in)
    m = x2.shape[0]

    # ---- tile selection -------------------------------------------------
    # Row tile: large (MXU-friendly), but capped for tiny inputs; always a
    # multiple of 8 (sublane).  Pad the row count to a whole number of tiles.
    tm_eff = min(tm, _round_up(m, 8))
    tm_eff = _round_up(tm_eff, 8)
    m_pad = _round_up(m, tm_eff)
    if m_pad != m:
        x2 = jnp.pad(x2, ((0, m_pad - m), (0, 0)))

    # Hidden-dim tile: largest multiple of 128 dividing H (<= th); otherwise
    # the whole hidden dim in one chunk (valid BlockSpec: block == full dim).
    th_eff = _pick_hidden_tile(hdim, th)
    n_h = hdim // th_eff

    b1_2d = b1.reshape(1, hdim)
    b2_2d = b2.reshape(1, d_out)

    # ---- VMEM budget / cost hints --------------------------------------
    xb = jnp.dtype(x.dtype).itemsize
    wb = jnp.dtype(w1.dtype).itemsize
    est = 2 * (tm_eff * d_in * xb            # x tile (double buffered)
               + d_in * th_eff * wb          # w1 chunk
               + th_eff * wb                 # b1 chunk
               + th_eff * d_out * wb         # w2 chunk
               + d_out * wb                  # b2
               + tm_eff * d_out * xb)        # output tile
    est += tm_eff * d_out * 4                # f32 accumulator
    vmem_limit = int(min(max(2 * est, 32 * 1024 * 1024), 64 * 1024 * 1024))

    cost = pl.CostEstimate(
        flops=2 * m_pad * d_in * hdim + 2 * m_pad * hdim * d_out,
        transcendentals=m_pad * hdim,
        bytes_accessed=(m_pad * d_in * xb
                        + d_in * hdim * wb + hdim * wb
                        + hdim * d_out * wb + d_out * wb
                        + m_pad * d_out * xb),
    )

    out_shape = jax.ShapeDtypeStruct((m_pad, d_out), x.dtype)

    if n_h == 1:
        # Fast path: single hidden chunk -> no scratch accumulator.
        out = pl.pallas_call(
            _mlp_kernel_single,
            out_shape=out_shape,
            grid_spec=pltpu.PrefetchScalarGridSpec(
                num_scalar_prefetch=0,
                grid=(m_pad // tm_eff,),
                in_specs=[
                    pl.BlockSpec((tm_eff, d_in), lambda i: (i, 0)),   # x rows
                    pl.BlockSpec((d_in, hdim), lambda i: (0, 0)),     # w1
                    pl.BlockSpec((1, hdim), lambda i: (0, 0)),        # b1
                    pl.BlockSpec((hdim, d_out), lambda i: (0, 0)),    # w2
                    pl.BlockSpec((1, d_out), lambda i: (0, 0)),       # b2
                ],
                out_specs=pl.BlockSpec((tm_eff, d_out), lambda i: (i, 0)),
            ),
            compiler_params=pltpu.CompilerParams(
                dimension_semantics=("parallel",),
                vmem_limit_bytes=vmem_limit,
            ),
            cost_estimate=cost,
        )(x2, w1, b1_2d, w2, b2_2d)
    else:
        out = pl.pallas_call(
            _mlp_kernel_multi,
            out_shape=out_shape,
            grid_spec=pltpu.PrefetchScalarGridSpec(
                num_scalar_prefetch=0,
                grid=(m_pad // tm_eff, n_h),
                in_specs=[
                    pl.BlockSpec((tm_eff, d_in), lambda i, k: (i, 0)),   # x
                    pl.BlockSpec((d_in, th_eff), lambda i, k: (0, k)),   # w1
                    pl.BlockSpec((1, th_eff), lambda i, k: (0, k)),      # b1
                    pl.BlockSpec((th_eff, d_out), lambda i, k: (k, 0)),  # w2
                    pl.BlockSpec((1, d_out), lambda i, k: (0, 0)),       # b2
                ],
                out_specs=pl.BlockSpec((tm_eff, d_out), lambda i, k: (i, 0)),
                scratch_shapes=[pltpu.VMEM((tm_eff, d_out), jnp.float32)],
            ),
            compiler_params=pltpu.CompilerParams(
                dimension_semantics=("parallel", "arbitrary"),
                vmem_limit_bytes=vmem_limit,
            ),
            cost_estimate=cost,
        )(x2, w1, b1_2d, w2, b2_2d)

    out = out[:m]
    return out.reshape(*orig_shape[:-1], d_out)


def init_mlp_params(key, in_features, hidden_features=None, out_features=None,
                    dtype=jnp.float32):
    """Deterministic synthetic init mirroring nn.Linear shapes.
    Returns weights already transposed to (in, out)."""
    out_features = out_features if out_features is not None else in_features
    hidden_features = hidden_features if hidden_features is not None else in_features
    k1, k2, k3, k4 = jax.random.split(key, 4)

    bound1 = 1.0 / math.sqrt(in_features)
    bound2 = 1.0 / math.sqrt(hidden_features)

    w1 = jax.random.uniform(k1, (in_features, hidden_features),
                            minval=-bound1, maxval=bound1, dtype=dtype)
    b1 = jax.random.uniform(k2, (hidden_features,),
                            minval=-bound1, maxval=bound1, dtype=dtype)
    w2 = jax.random.uniform(k3, (hidden_features, out_features),
                            minval=-bound2, maxval=bound2, dtype=dtype)
    b2 = jax.random.uniform(k4, (out_features,),
                            minval=-bound2, maxval=bound2, dtype=dtype)
    return w1, b1, w2, b2


def mlp_reference(x, w1, b1, w2, b2):
    """Pure-JAX reference for correctness checking."""
    h = jnp.dot(x, w1) + b1
    h = 0.5 * h * (1.0 + lax.erf(h / math.sqrt(2.0)))
    return jnp.dot(h, w2) + b2


if __name__ == "__main__":
    key = jax.random.PRNGKey(0)

    # --- Case 1: small shapes consistent with the module (single H chunk) ---
    B, S = 2, 8
    D_IN, HID, D_OUT = 16, 32, 16
    k_x, k_p, key = jax.random.split(key, 3)
    x = jax.random.normal(k_x, (B, S, D_IN), dtype=jnp.float32)
    w1, b1, w2, b2 = init_mlp_params(k_p, D_IN, HID, D_OUT)

    y = mlp_pallas(x, w1, b1, w2, b2)
    y = jax.block_until_ready(y)
    y_ref = mlp_reference(x, w1, b1, w2, b2)
    assert y.shape == (B, S, D_OUT)
    assert jnp.allclose(y, y_ref, atol=1e-5, rtol=1e-5), "case1 mismatch"

    # --- Case 2: exercises the multi-chunk hidden reduction (2 x tH=128) ---
    B2, S2 = 2, 8
    D_IN2, HID2, D_OUT2 = 128, 256, 128
    k_x2, k_p2, key = jax.random.split(key, 3)
    x2 = jax.random.normal(k_x2, (B2, S2, D_IN2), dtype=jnp.float32)
    w1b, b1b, w2b, b2b = init_mlp_params(k_p2, D_IN2, HID2, D_OUT2)

    y2 = mlp_pallas(x2, w1b, b1b, w2b, b2b, th=128)
    y2 = jax.block_until_ready(y2)
    y2_ref = mlp_reference(x2, w1b, b1b, w2b, b2b)
    assert y2.shape == (B2, S2, D_OUT2)
    assert jnp.allclose(y2, y2_ref, atol=1e-4, rtol=1e-4), "case2 mismatch"

    print("KERNEL_OK")
</pallas_src>

<mosaic_0001>
module attributes {stable_mosaic.version = 11 : i64} {
  func.func @_mlp_kernel_single(%arg0: i32, %arg1: memref<16x16xf32, #tpu.memory_space<vmem>>, %arg2: memref<16x32xf32, #tpu.memory_space<vmem>>, %arg3: memref<1x32xf32, #tpu.memory_space<vmem>>, %arg4: memref<32x16xf32, #tpu.memory_space<vmem>>, %arg5: memref<1x16xf32, #tpu.memory_space<vmem>>, %arg6: memref<16x16xf32, #tpu.memory_space<vmem>>) attributes {dimension_semantics = [#tpu.dimension_semantics<parallel>], iteration_bounds = array<i64: 1>, scalar_prefetch = 0 : i64, scratch_operands = 0 : i64, tpu.core_type = #tpu.core_type<tc>, window_params = [{transform_indices = @transform_0, window_bounds = array<i64: 16, 16>}, {pipeline_mode = #tpu.pipeline_mode<synchronous>, transform_indices = @transform_1, window_bounds = array<i64: 16, 32>}, {pipeline_mode = #tpu.pipeline_mode<synchronous>, transform_indices = @transform_2, window_bounds = array<i64: 1, 32>}, {pipeline_mode = #tpu.pipeline_mode<synchronous>, transform_indices = @transform_3, window_bounds = array<i64: 32, 16>}, {pipeline_mode = #tpu.pipeline_mode<synchronous>, transform_indices = @transform_4, window_bounds = array<i64: 1, 16>}, {transform_indices = @transform_5, window_bounds = array<i64: 16, 16>}]} {
    %c0 = arith.constant 0 : index
    %c0_0 = arith.constant 0 : index
    %0 = vector.load %arg1[%c0, %c0_0] : memref<16x16xf32, #tpu.memory_space<vmem>>, vector<16x16xf32>
    %c0_1 = arith.constant 0 : index
    %c0_2 = arith.constant 0 : index
    %1 = vector.load %arg2[%c0_1, %c0_2] : memref<16x32xf32, #tpu.memory_space<vmem>>, vector<16x32xf32>
    %cst = arith.constant dense<0.000000e+00> : vector<16x32xf32>
    %2 = tpu.matmul %0, %1, %cst {dimension_numbers = #tpu.dot_dimension_numbers<[1], [0], [0], [1], [0, 0, 1, 1], [], []>} : vector<16x16xf32>, vector<16x32xf32>, vector<16x32xf32> -> vector<16x32xf32>
    %c0_3 = arith.constant 0 : index
    %c0_4 = arith.constant 0 : index
    %3 = vector.load %arg3[%c0_3, %c0_4] : memref<1x32xf32, #tpu.memory_space<vmem>>, vector<1x32xf32>
    %4 = vector.broadcast %3 : vector<1x32xf32> to vector<16x32xf32>
    %5 = arith.addf %2, %4 : vector<16x32xf32>
    %cst_5 = arith.constant 5.000000e-01 : f32
    %6 = vector.broadcast %cst_5 : f32 to vector<16x32xf32>
    %7 = arith.mulf %6, %5 : vector<16x32xf32>
    %cst_6 = arith.constant 0.707106769 : f32
    %8 = vector.broadcast %cst_6 : f32 to vector<16x32xf32>
    %9 = arith.mulf %5, %8 : vector<16x32xf32>
    %10 = math.erf %9 : vector<16x32xf32>
    %cst_7 = arith.constant 1.000000e+00 : f32
    %11 = vector.broadcast %cst_7 : f32 to vector<16x32xf32>
    %12 = arith.addf %11, %10 : vector<16x32xf32>
    %13 = arith.mulf %7, %12 : vector<16x32xf32>
    %c0_8 = arith.constant 0 : index
    %c0_9 = arith.constant 0 : index
    %14 = vector.load %arg4[%c0_8, %c0_9] : memref<32x16xf32, #tpu.memory_space<vmem>>, vector<32x16xf32>
    %cst_10 = arith.constant dense<0.000000e+00> : vector<16x16xf32>
    %15 = tpu.matmul %13, %14, %cst_10 {dimension_numbers = #tpu.dot_dimension_numbers<[1], [0], [0], [1], [0, 0, 1, 1], [], []>} : vector<16x32xf32>, vector<32x16xf32>, vector<16x16xf32> -> vector<16x16xf32>
    %c0_11 = arith.constant 0 : index
    %c0_12 = arith.constant 0 : index
    %16 = vector.load %arg5[%c0_11, %c0_12] : memref<1x16xf32, #tpu.memory_space<vmem>>, vector<1x16xf32>
    %17 = vector.broadcast %16 : vector<1x16xf32> to vector<16x16xf32>
    %18 = arith.addf %15, %17 : vector<16x16xf32>
    %c0_13 = arith.constant 0 : index
    %c0_14 = arith.constant 0 : index
    %19 = vector.load %arg6[%c0_13, %c0_14] : memref<16x16xf32, #tpu.memory_space<vmem>>, vector<16x16xf32>
    tpu.vector_store %arg6[%c0_13, %c0_14], %18 {strides = array<i32>} : memref<16x16xf32, #tpu.memory_space<vmem>>, vector<16x16xf32>,
    return
  }
  func.func @transform_0(%arg0: i32) -> (i32, i32) {
    %c0_i32 = arith.constant 0 : i32
    %c0_i32_0 = arith.constant 0 : i32
    return %arg0, %c0_i32 : i32, i32
  }
  func.func @transform_1(%arg0: i32) -> (i32, i32) {
    %c0_i32 = arith.constant 0 : i32
    %c0_i32_0 = arith.constant 0 : i32
    %c0_i32_1 = arith.constant 0 : i32
    return %c0_i32, %c0_i32_0 : i32, i32
  }
  func.func @transform_2(%arg0: i32) -> (i32, i32) {
    %c0_i32 = arith.constant 0 : i32
    %c0_i32_0 = arith.constant 0 : i32
    %c0_i32_1 = arith.constant 0 : i32
    return %c0_i32, %c0_i32_0 : i32, i32
  }
  func.func @transform_3(%arg0: i32) -> (i32, i32) {
    %c0_i32 = arith.constant 0 : i32
    %c0_i32_0 = arith.constant 0 : i32
    %c0_i32_1 = arith.constant 0 : i32
    return %c0_i32, %c0_i32_0 : i32, i32
  }
  func.func @transform_4(%arg0: i32) -> (i32, i32) {
    %c0_i32 = arith.constant 0 : i32
    %c0_i32_0 = arith.constant 0 : i32
    %c0_i32_1 = arith.constant 0 : i32
    return %c0_i32, %c0_i32_0 : i32, i32
  }
  func.func @transform_5(%arg0: i32) -> (i32, i32) {
    %c0_i32 = arith.constant 0 : i32
    %c0_i32_0 = arith.constant 0 : i32
    return %arg0, %c0_i32 : i32, i32
  }
}

</mosaic_0001>

<llo_original>
// kernel: mlp_pallas.1
$region0: #{mlp_pallas.1}
  #allocation0 [shape = 'u32[]', space=smem, size = 0x4, offset = 0x4, fixed_abs, tag = 'smem constant byte address 0x4 - core index']
  #allocation1 [shape = 'u32[72,128]{1,0:T(1,128)}', space=vmem, size = 0x9000, scoped, tag = 'internal scratch']
  %s0 = inlined_call_operand.vmem [shape: f32[16,16], index: 0, kind: input, shape index: {}]
  %s1 = inlined_call_operand.vmem [shape: f32[16,32], index: 1, kind: input, shape index: {}]
  %s2 = inlined_call_operand.vmem [shape: f32[1,32], index: 2, kind: input, shape index: {}]
  %s3 = inlined_call_operand.vmem [shape: f32[32,16], index: 3, kind: input, shape index: {}]
  %s4 = inlined_call_operand.vmem [shape: f32[1,16], index: 4, kind: input, shape index: {}]
  %s5 = inlined_call_operand.hbm [shape: f32[16,16], index: 5, kind: output, shape index: {}]
  %s6 = sld [smem:[#allocation0]]
  $region30: #{mlp_pallas.1} parent=0
    _
  %s8 = ssub.s32 1, %s6
  %s9 = scalar_select 0, %s8, %s6
  $region1: #{mlp_pallas.1} parent=0
    #allocation2 [shape = 'u8[8192]{0}', space=vmem, size = 0x2000, scoped, tag = 'output window, operand 0, single buffered']
    #allocation3 [shape = 's32[1]{0}', space=sflag, size = 0x4, scoped, tag = 'scoped memory for mlp_pallas.1']
    %10 = vsyncpa [#allocation3], 0
    // Predicated region
    $region2: #{mlp_pallas.1} parent=1 // pred_check
      _
    $region3: #{mlp_pallas.1} parent=1 // pred_check_branch
      %12 = sbr.rel (0) target = $region5
    $region4: #{mlp_pallas.1} parent=1 // pred_region
      _
    $region5: #{mlp_pallas.1} parent=1 // pred_fallthru
      _
    // Predicated region
    $region6: #{mlp_pallas.1} parent=1 // pred_check
      _
    $region7: #{mlp_pallas.1} parent=1 // pred_check_branch
      %14 = sbr.rel (0) target = $region9
    $region8: #{mlp_pallas.1} parent=1 // pred_region
      _
    $region9: #{mlp_pallas.1} parent=1 // pred_fallthru
      _
    // Predicated region
    $region10: #{mlp_pallas.1} parent=1 // pred_check
      _
    $region11: #{mlp_pallas.1} parent=1 // pred_check_branch
      %16 = sbr.rel (0) target = $region13
    $region12: #{mlp_pallas.1} parent=1 // pred_region
      _
    $region13: #{mlp_pallas.1} parent=1 // pred_fallthru
      _
    // Predicated region
    $region14: #{mlp_pallas.1} parent=1 // pred_check
      _
    $region15: #{mlp_pallas.1} parent=1 // pred_check_branch
      %18 = sbr.rel (0) target = $region17
    $region16: #{mlp_pallas.1} parent=1 // pred_region
      _
    $region17: #{mlp_pallas.1} parent=1 // pred_fallthru
      _
    // Predicated region
    $region18: #{mlp_pallas.1} parent=1 // pred_check
      _
    $region19: #{mlp_pallas.1} parent=1 // pred_check_branch
      %20 = sbr.rel (0) target = $region21
    $region20: #{mlp_pallas.1} parent=1 // pred_region
      _
    $region21: #{mlp_pallas.1} parent=1 // pred_fallthru
      _
    %v21 = vld [vmem:[%s0] sm:$0xff]
    %v22 = vld [vmem:[%s0 + $0x8] sm:$0xff]
    %v23 = vld [vmem:[%s1] sm:$0xff]
    %v24 = vld [vmem:[%s1 + $0x8] sm:$0xff]
    %v25 = vld [vmem:[%s2] sm:$0x1]
    %v27 = vperm.slane %v25, 0
    %vm29 = vcmask 130048
    %v31 = vsel %vm29, %v21, 0
    %v34 = vsel %vm29, %v22, 0
    %36 = vmatpush.msra.mxu0 0.0
    %37 = vmatpush.msra.mxu0 0.0
    %38 = vmatpush.msra.mxu0 0.0
    %39 = vmatpush.msra.mxu0 0.0
    %40 = vmatpush.msra.mxu0 0.0
    %41 = vmatpush.msra.mxu0 0.0
    %42 = vmatpush.msra.mxu0 0.0
    %43 = vmatpush.msra.mxu0 0.0
    %44 = vmatpush.msra.mxu0 0.0
    %45 = vmatpush.msra.mxu0 0.0
    %46 = vmatpush.msra.mxu0 0.0
    %47 = vmatpush.msra.mxu0 0.0
    %48 = vmatpush.msra.mxu0 0.0
    %49 = vmatpush.msra.mxu0 0.0
    %50 = vmatpush.msra.mxu0 %v24
    %51 = vmatpush.msra.mxu0 %v23
    %52 = vmatmul.f32.gmra.mxu0 %v31
    %v53 = vpop.f32.mrf.mxu0
    %v54 = vadd.f32 %v27, %v53
    %55 = vmatmul.f32.gmra.mxu0 %v34
    %v56 = vpop.f32.mrf.mxu0
    %v57 = vadd.f32 %v27, %v56
    %58 = vdwg.mxu0
    %v59 = vmul.f32 %v54, 0.5
    %v60 = vmul.f32 %v57, 0.5
    %v61 = vmul.f32 %v54, 0.70710677
    %v62 = vmul.f32 %v57, 0.70710677
    %v63 = vmul.f32 %v61, %v61
    %v64 = vmin.f32 16.0, %v63
    %v65 = vmul.f32 %v64, 2.1237322e-06
    %v66 = vadd.f32 %v65, 0.00028619796
    %v67 = vmul.f32 %v64, %v66
    %v68 = vadd.f32 %v67, 0.0036580483
    %v69 = vmul.f32 %v64, %v68
    %v70 = vadd.f32 %v69, 0.05243302
    %v71 = vmul.f32 %v64, %v70
    %v72 = vadd.f32 %v71, 0.18741608
    %v73 = vmul.f32 %v64, %v72
    %v74 = vadd.f32 %v73, 1.1283791
    %v75 = vmul.f32 %v61, %v74
    %v76 = vmul.f32 %v64, 3.8918573e-05
    %v77 = vadd.f32 %v76, 0.001143296
    %v78 = vmul.f32 %v64, %v77
    %v79 = vadd.f32 %v78, 0.014752088
    %v80 = vmul.f32 %v64, %v79
    %v81 = vadd.f32 %v80, 0.112945676
    %v82 = vmul.f32 %v64, %v81
    %v83 = vadd.f32 %v82, 0.4994258
    %v84 = vmul.f32 %v64, %v83
    %v85 = vadd.f32 %v84, 1.0
    %v86 = vrcp.pop %v85
    %v87 = vmul.f32 %v85, %v86
    %v88 = vsub.f32 1.0, %v87
    %v89 = vmul.f32 %v86, %v88
    %v90 = vadd.f32 %v86, %v89
    %vm91 = vweird.f32 %v85
    %vm92 = vweird.f32 %v86
    %vm93 = vmor %vm91, %vm92
    %v94 = vsel %vm93, %v86, %v90
    %v95 = vand.u32 2147483647, %v85
    %vm96 = vcmp.eq.f32.partialorder %v95, 8.507059e+37
    %v97 = vand.u32 %v85, 2147483648
    %v98 = vor.u32 1.1754944e-38, %v97
    %v99 = vsel %vm96, %v98, %v94
    %v100 = vmul.f32 %v75, %v99
    %v101 = vmin.f32 %v100, 1.0
    %v102 = vmax.f32 %v101, -1.0
    %v103 = vmul.f32 %v62, %v62
    %v104 = vmin.f32 16.0, %v103
    %v105 = vmul.f32 %v104, 2.1237322e-06
    %v106 = vadd.f32 %v105, 0.00028619796
    %v107 = vmul.f32 %v104, %v106
    %v108 = vadd.f32 %v107, 0.0036580483
    %v109 = vmul.f32 %v104, %v108
    %v110 = vadd.f32 %v109, 0.05243302
    %v111 = vmul.f32 %v104, %v110
    %v112 = vadd.f32 %v111, 0.18741608
    %v113 = vmul.f32 %v104, %v112
    %v114 = vadd.f32 %v113, 1.1283791
    %v115 = vmul.f32 %v62, %v114
    %v116 = vmul.f32 %v104, 3.8918573e-05
    %v117 = vadd.f32 %v116, 0.001143296
    %v118 = vmul.f32 %v104, %v117
    %v119 = vadd.f32 %v118, 0.014752088
    %v120 = vmul.f32 %v104, %v119
    %v121 = vadd.f32 %v120, 0.112945676
    %v122 = vmul.f32 %v104, %v121
    %v123 = vadd.f32 %v122, 0.4994258
    %v124 = vmul.f32 %v104, %v123
    %v125 = vadd.f32 %v124, 1.0
    %v126 = vrcp.pop %v125
    %v127 = vmul.f32 %v125, %v126
    %v128 = vsub.f32 1.0, %v127
    %v129 = vmul.f32 %v126, %v128
    %v130 = vadd.f32 %v126, %v129
    %vm131 = vweird.f32 %v125
    %vm132 = vweird.f32 %v126
    %vm133 = vmor %vm131, %vm132
    %v134 = vsel %vm133, %v126, %v130
    %v135 = vand.u32 2147483647, %v125
    %vm136 = vcmp.eq.f32.partialorder %v135, 8.507059e+37
    %v137 = vand.u32 %v125, 2147483648
    %v138 = vor.u32 1.1754944e-38, %v137
    %v139 = vsel %vm136, %v138, %v134
    %v140 = vmul.f32 %v115, %v139
    %v141 = vmin.f32 %v140, 1.0
    %v142 = vmax.f32 %v141, -1.0
    %v143 = vadd.f32 %v102, 1.0
    %v144 = vadd.f32 %v142, 1.0
    %v145 = vmul.f32 %v59, %v143
    %v146 = vmul.f32 %v60, %v144
    %v147 = vld [vmem:[%s3] sm:$0xff]
    %v148 = vld [vmem:[%s3 + $0x8] sm:$0xff]
    %v149 = vld [vmem:[%s3 + $0x10] sm:$0xff]
    %v150 = vld [vmem:[%s3 + $0x18] sm:$0xff]
    %v151 = vld [vmem:[%s4] sm:$0x1]
    %v153 = vperm.slane %v151, 0
    %vm155 = vcmask 261120
    %v157 = vsel %vm155, %v145, 0
    %v160 = vsel %vm155, %v146, 0
    %162 = vmatpush.msra.mxu0 0.0
    %163 = vmatpush.msra.mxu0 0.0
    %164 = vmatpush.msra.mxu0 0.0
    %165 = vmatpush.msra.mxu0 0.0
    %166 = vmatpush.msra.mxu0 0.0
    %167 = vmatpush.msra.mxu0 0.0
    %168 = vmatpush.msra.mxu0 0.0
    %169 = vmatpush.msra.mxu0 0.0
    %170 = vmatpush.msra.mxu0 0.0
    %171 = vmatpush.msra.mxu0 0.0
    %172 = vmatpush.msra.mxu0 0.0
    %173 = vmatpush.msra.mxu0 0.0
    %174 = vmatpush.msra.mxu0 %v150
    %175 = vmatpush.msra.mxu0 %v149
    %176 = vmatpush.msra.mxu0 %v148
    %177 = vmatpush.msra.mxu0 %v147
    %178 = vmatmul.f32.gmra.mxu0 %v157
    %v179 = vpop.f32.mrf.mxu0
    %v180 = vadd.f32 %v153, %v179
    %181 = vmatmul.f32.gmra.mxu0 %v160
    %v182 = vpop.f32.mrf.mxu0
    %v183 = vadd.f32 %v153, %v182
    %184 = vdwg.mxu0
    %185 = vst.msk [vmem:[#allocation2] sm:$0xff] %vm29, %v180
    %186 = vst.msk [vmem:[#allocation2 + $0x8] sm:$0xff] %vm29, %v183
    // Predicated region
    $region22: #{mlp_pallas.1} parent=1 // pred_check
      _
    $region23: #{mlp_pallas.1} parent=1 // pred_check_branch
      %188 = sbr.rel (0) target = $region25
    $region24: #{mlp_pallas.1} parent=1 // pred_region
      %190 = vsyncadd [#allocation3], 0
      %s191 = sshll.u32 [#allocation2], 4
      %s192 = int_to_ptr.vmem [resolvable:$true] %s191
      %s193 = sshll.u32 %s5, 4
      %s194 = int_to_ptr.hbm [resolvable:$true] %s193
      %199 = dma.vmem_to_hbm [thread:$0]  %s192, 256, %s194, [#allocation3], 128, 128, 8
    $region25: #{mlp_pallas.1} parent=1 // pred_fallthru
      _
    // Predicated region
    $region26: #{mlp_pallas.1} parent=1 // pred_check
      _
    $region27: #{mlp_pallas.1} parent=1 // pred_check_branch
      %201 = sbr.rel (0) target = $region29
    $region28: #{mlp_pallas.1} parent=1 // pred_region
      %203 = dma.done [#allocation3], 256
    $region29: #{mlp_pallas.1} parent=1 // pred_fallthru
      _
    %204 = vsyncpa [#allocation3], 1

</llo_original>
